<compile_context>
chip_gen: v6e
topology: v6e:2x2x1
jax: 0.10.0
libtpu: 0.0.40
codegen_flags: <defaults>
</compile_context>

<pallas_src>
import jax
import jax.numpy as jnp
from jax.experimental import pallas as pl
from jax.experimental.pallas import tpu as pltpu

# ---- model hyper-parameters (mirror the PyTorch __init__) -------------------
START_DIM = 16           # start_dim
HIDDEN_DIM = 32          # hidden_dim
OUT_DIM = 2              # out_dim (n = 2 in the reference script)
NUM_HIDDEN_LAYERS = 3    # num_hidden_layers = [3]
NUM_LAYERS = NUM_HIDDEN_LAYERS + 2   # fc1 + 3 hidden + out = 5
DROPOUT_P = 0.2          # dropout (identity at inference)

LANE = 128               # pad all feature dims to one full vreg lane width
SUBLANE = 8
PAD_ROWS = LANE + SUBLANE  # 128 weight rows + bias row, rounded to sublane tile
BATCH = 16


def _mlp_kernel(x_ref, p_ref, o_ref):
    """Entire forward pass, fused, single invocation, everything 128-lane padded."""
    h = x_ref[...]                                # (Bp, 128); cols >= START_DIM are 0
    for l in range(NUM_LAYERS):                   # static unroll, 5 layers
        layer = p_ref[l]                          # (136, 128) - static index, one load
        w = layer[:LANE]                          # (128, 128) zero-padded weight
        b = layer[LANE:LANE + 1]                  # (1, 128)   zero-padded bias
        h = jnp.dot(h, w, preferred_element_type=jnp.float32) + b
        if l < NUM_LAYERS - 1:
            h = jnp.maximum(h, 0.0)               # ReLU
            # TODO(synk): training-mode dropout (p=0.2) omitted; eval semantics.
    # Lane-dense (128-wide) store; padded logits are 0 -> sigmoid 0.5, sliced off
    # in the wrapper.
    o_ref[...] = jax.nn.sigmoid(h).astype(o_ref.dtype)


def mlp_forward(x, params):
    """x: (B, START_DIM) f32, params: (NUM_LAYERS, PAD_ROWS, LANE) f32.

    Returns (B, OUT_DIM) f32. Single grid-less pallas_call: whole problem is
    VMEM-resident (~360 KiB), no batch tiling, no pipeline steps.
    """
    B = x.shape[0]
    Bp = max(SUBLANE, ((B + SUBLANE - 1) // SUBLANE) * SUBLANE)  # sublane-align batch
    x_pad = jnp.zeros((Bp, LANE), jnp.float32).at[:B, :START_DIM].set(x)
    y_pad = pl.pallas_call(
        _mlp_kernel,
        out_shape=jax.ShapeDtypeStruct((Bp, LANE), jnp.float32),
        in_specs=[
            pl.BlockSpec(memory_space=pltpu.MemorySpace.VMEM),   # padded activations
            pl.BlockSpec(memory_space=pltpu.MemorySpace.VMEM),   # packed params (1 DMA)
        ],
        out_specs=pl.BlockSpec(memory_space=pltpu.MemorySpace.VMEM),
    )(x_pad, params)
    return y_pad[:B, :OUT_DIM]


# ---- parameter construction / packing ---------------------------------------
def _init_linear(key, in_dim, out_dim):
    """PyTorch-style init: W, b ~ U(-k, k), k = 1/sqrt(in_dim). Returns W as (in, out)."""
    kw, kb = jax.random.split(key)
    bound = 1.0 / (in_dim ** 0.5)
    w = jax.random.uniform(kw, (out_dim, in_dim), jnp.float32, -bound, bound).T
    b = jax.random.uniform(kb, (out_dim,), jnp.float32, -bound, bound)
    return w, b


def pack_params(w1, b1, wh, bh, wo, bo):
    """Zero-pad every layer to (128 in, 128 out) and stack weight+bias blocks."""
    def pad_layer(w, b):
        blk = jnp.zeros((PAD_ROWS, LANE), jnp.float32)
        blk = blk.at[:w.shape[0], :w.shape[1]].set(w)   # rows 0..127: weight
        blk = blk.at[LANE, :b.shape[0]].set(b)          # row 128: bias
        return blk

    blocks = [pad_layer(w1, b1)]
    for l in range(NUM_HIDDEN_LAYERS):
        blocks.append(pad_layer(wh[l], bh[l]))
    blocks.append(pad_layer(wo, bo))
    return jnp.stack(blocks)                            # (NUM_LAYERS, 136, 128)


def reference_forward(x, w1, b1, wh, bh, wo, bo):
    h = jnp.maximum(x @ w1 + b1, 0.0)
    for l in range(NUM_HIDDEN_LAYERS):
        h = jnp.maximum(h @ wh[l] + bh[l], 0.0)
    return jax.nn.sigmoid(h @ wo + bo)


if __name__ == "__main__":
    root = jax.random.PRNGKey(0)
    keys = jax.random.split(root, NUM_HIDDEN_LAYERS + 3)

    # fc1
    w1, b1 = _init_linear(keys[0], START_DIM, HIDDEN_DIM)
    # hidden layers
    wh_list, bh_list = [], []
    for l in range(NUM_HIDDEN_LAYERS):
        w, b = _init_linear(keys[1 + l], HIDDEN_DIM, HIDDEN_DIM)
        wh_list.append(w)
        bh_list.append(b)
    wh = jnp.stack(wh_list)                    # (L, HIDDEN_DIM, HIDDEN_DIM)
    bh = jnp.stack(bh_list)                    # (L, HIDDEN_DIM)
    # output layer
    wo, bo = _init_linear(keys[1 + NUM_HIDDEN_LAYERS], HIDDEN_DIM, OUT_DIM)

    params = pack_params(w1, b1, wh, bh, wo, bo)
    x = jax.random.normal(keys[2 + NUM_HIDDEN_LAYERS], (BATCH, START_DIM),
                          jnp.float32)

    y = jax.block_until_ready(mlp_forward(x, params))

    y_ref = reference_forward(x, w1, b1, wh, bh, wo, bo)
    assert y.shape == (BATCH, OUT_DIM)
    assert jnp.allclose(y, y_ref, atol=1e-5, rtol=1e-5), \
        float(jnp.max(jnp.abs(y - y_ref)))

    print("KERNEL_OK")
</pallas_src>

<mosaic_0001>
module attributes {stable_mosaic.version = 11 : i64} {
  func.func @_mlp_kernel(%arg0: memref<16x128xf32, #tpu.memory_space<vmem>>, %arg1: memref<5x136x128xf32, #tpu.memory_space<vmem>>, %arg2: memref<16x128xf32, #tpu.memory_space<vmem>>) attributes {dimension_semantics = [], scalar_prefetch = 0 : i64, scratch_operands = 0 : i64, tpu.core_type = #tpu.core_type<tc>} {
    %c0 = arith.constant 0 : index
    %c0_0 = arith.constant 0 : index
    %0 = vector.load %arg0[%c0, %c0_0] : memref<16x128xf32, #tpu.memory_space<vmem>>, vector<16x128xf32>
    %c0_1 = arith.constant 0 : index
    %c0_2 = arith.constant 0 : index
    %c0_3 = arith.constant 0 : index
    %1 = vector.load %arg1[%c0_1, %c0_2, %c0_3] : memref<5x136x128xf32, #tpu.memory_space<vmem>>, vector<1x136x128xf32>
    %2 = vector.shape_cast %1 : vector<1x136x128xf32> to vector<136x128xf32>
    %3 = vector.extract_strided_slice %2 {offsets = [0, 0], sizes = [128, 128], strides = [1, 1]} : vector<136x128xf32> to vector<128x128xf32>
    %4 = vector.extract_strided_slice %2 {offsets = [128, 0], sizes = [1, 128], strides = [1, 1]} : vector<136x128xf32> to vector<1x128xf32>
    %cst = arith.constant dense<0.000000e+00> : vector<16x128xf32>
    %5 = tpu.matmul %0, %3, %cst {dimension_numbers = #tpu.dot_dimension_numbers<[1], [0], [0], [1], [0, 0, 1, 1], [], []>} : vector<16x128xf32>, vector<128x128xf32>, vector<16x128xf32> -> vector<16x128xf32>
    %6 = vector.broadcast %4 : vector<1x128xf32> to vector<16x128xf32>
    %7 = arith.addf %5, %6 : vector<16x128xf32>
    %cst_4 = arith.constant 0.000000e+00 : f32
    %8 = vector.broadcast %cst_4 : f32 to vector<16x128xf32>
    %9 = arith.maximumf %7, %8 : vector<16x128xf32>
    %c1 = arith.constant 1 : index
    %c0_5 = arith.constant 0 : index
    %c0_6 = arith.constant 0 : index
    %10 = vector.load %arg1[%c1, %c0_5, %c0_6] : memref<5x136x128xf32, #tpu.memory_space<vmem>>, vector<1x136x128xf32>
    %11 = vector.shape_cast %10 : vector<1x136x128xf32> to vector<136x128xf32>
    %12 = vector.extract_strided_slice %11 {offsets = [0, 0], sizes = [128, 128], strides = [1, 1]} : vector<136x128xf32> to vector<128x128xf32>
    %13 = vector.extract_strided_slice %11 {offsets = [128, 0], sizes = [1, 128], strides = [1, 1]} : vector<136x128xf32> to vector<1x128xf32>
    %cst_7 = arith.constant dense<0.000000e+00> : vector<16x128xf32>
    %14 = tpu.matmul %9, %12, %cst_7 {dimension_numbers = #tpu.dot_dimension_numbers<[1], [0], [0], [1], [0, 0, 1, 1], [], []>} : vector<16x128xf32>, vector<128x128xf32>, vector<16x128xf32> -> vector<16x128xf32>
    %15 = vector.broadcast %13 : vector<1x128xf32> to vector<16x128xf32>
    %16 = arith.addf %14, %15 : vector<16x128xf32>
    %cst_8 = arith.constant 0.000000e+00 : f32
    %17 = vector.broadcast %cst_8 : f32 to vector<16x128xf32>
    %18 = arith.maximumf %16, %17 : vector<16x128xf32>
    %c2 = arith.constant 2 : index
    %c0_9 = arith.constant 0 : index
    %c0_10 = arith.constant 0 : index
    %19 = vector.load %arg1[%c2, %c0_9, %c0_10] : memref<5x136x128xf32, #tpu.memory_space<vmem>>, vector<1x136x128xf32>
    %20 = vector.shape_cast %19 : vector<1x136x128xf32> to vector<136x128xf32>
    %21 = vector.extract_strided_slice %20 {offsets = [0, 0], sizes = [128, 128], strides = [1, 1]} : vector<136x128xf32> to vector<128x128xf32>
    %22 = vector.extract_strided_slice %20 {offsets = [128, 0], sizes = [1, 128], strides = [1, 1]} : vector<136x128xf32> to vector<1x128xf32>
    %cst_11 = arith.constant dense<0.000000e+00> : vector<16x128xf32>
    %23 = tpu.matmul %18, %21, %cst_11 {dimension_numbers = #tpu.dot_dimension_numbers<[1], [0], [0], [1], [0, 0, 1, 1], [], []>} : vector<16x128xf32>, vector<128x128xf32>, vector<16x128xf32> -> vector<16x128xf32>
    %24 = vector.broadcast %22 : vector<1x128xf32> to vector<16x128xf32>
    %25 = arith.addf %23, %24 : vector<16x128xf32>
    %cst_12 = arith.constant 0.000000e+00 : f32
    %26 = vector.broadcast %cst_12 : f32 to vector<16x128xf32>
    %27 = arith.maximumf %25, %26 : vector<16x128xf32>
    %c3 = arith.constant 3 : index
    %c0_13 = arith.constant 0 : index
    %c0_14 = arith.constant 0 : index
    %28 = vector.load %arg1[%c3, %c0_13, %c0_14] : memref<5x136x128xf32, #tpu.memory_space<vmem>>, vector<1x136x128xf32>
    %29 = vector.shape_cast %28 : vector<1x136x128xf32> to vector<136x128xf32>
    %30 = vector.extract_strided_slice %29 {offsets = [0, 0], sizes = [128, 128], strides = [1, 1]} : vector<136x128xf32> to vector<128x128xf32>
    %31 = vector.extract_strided_slice %29 {offsets = [128, 0], sizes = [1, 128], strides = [1, 1]} : vector<136x128xf32> to vector<1x128xf32>
    %cst_15 = arith.constant dense<0.000000e+00> : vector<16x128xf32>
    %32 = tpu.matmul %27, %30, %cst_15 {dimension_numbers = #tpu.dot_dimension_numbers<[1], [0], [0], [1], [0, 0, 1, 1], [], []>} : vector<16x128xf32>, vector<128x128xf32>, vector<16x128xf32> -> vector<16x128xf32>
    %33 = vector.broadcast %31 : vector<1x128xf32> to vector<16x128xf32>
    %34 = arith.addf %32, %33 : vector<16x128xf32>
    %cst_16 = arith.constant 0.000000e+00 : f32
    %35 = vector.broadcast %cst_16 : f32 to vector<16x128xf32>
    %36 = arith.maximumf %34, %35 : vector<16x128xf32>
    %c4 = arith.constant 4 : index
    %c0_17 = arith.constant 0 : index
    %c0_18 = arith.constant 0 : index
    %37 = vector.load %arg1[%c4, %c0_17, %c0_18] : memref<5x136x128xf32, #tpu.memory_space<vmem>>, vector<1x136x128xf32>
    %38 = vector.shape_cast %37 : vector<1x136x128xf32> to vector<136x128xf32>
    %39 = vector.extract_strided_slice %38 {offsets = [0, 0], sizes = [128, 128], strides = [1, 1]} : vector<136x128xf32> to vector<128x128xf32>
    %40 = vector.extract_strided_slice %38 {offsets = [128, 0], sizes = [1, 128], strides = [1, 1]} : vector<136x128xf32> to vector<1x128xf32>
    %cst_19 = arith.constant dense<0.000000e+00> : vector<16x128xf32>
    %41 = tpu.matmul %36, %39, %cst_19 {dimension_numbers = #tpu.dot_dimension_numbers<[1], [0], [0], [1], [0, 0, 1, 1], [], []>} : vector<16x128xf32>, vector<128x128xf32>, vector<16x128xf32> -> vector<16x128xf32>
    %42 = vector.broadcast %40 : vector<1x128xf32> to vector<16x128xf32>
    %43 = arith.addf %41, %42 : vector<16x128xf32>
    %44 = arith.negf %43 : vector<16x128xf32>
    %45 = math.exp %44 : vector<16x128xf32>
    %cst_20 = arith.constant 1.000000e+00 : f32
    %46 = vector.broadcast %cst_20 : f32 to vector<16x128xf32>
    %47 = arith.addf %46, %45 : vector<16x128xf32>
    %48 = arith.divf %46, %47 : vector<16x128xf32>
    %c0_21 = arith.constant 0 : index
    %c0_22 = arith.constant 0 : index
    %49 = vector.load %arg2[%c0_21, %c0_22] : memref<16x128xf32, #tpu.memory_space<vmem>>, vector<16x128xf32>
    tpu.vector_store %arg2[%c0_21, %c0_22], %48 {strides = array<i32>} : memref<16x128xf32, #tpu.memory_space<vmem>>, vector<16x128xf32>,
    return
  }
}

</mosaic_0001>

<llo_original>
// kernel: tpu_custom_call.1
$region0: #{tpu_custom_call.1}
  #allocation0 [shape = 'u32[]', space=smem, size = 0x4, offset = 0x4, fixed_abs, tag = 'smem constant byte address 0x4 - core index']
  #allocation1 [shape = 'u32[144,128]{1,0:T(1,128)}', space=vmem, size = 0x12000, scoped, tag = 'internal scratch']
  %s0 = inlined_call_operand.hbm [shape: f32[16,128], index: 0, kind: input, shape index: {}]
  %s1 = inlined_call_operand.hbm [shape: f32[5,136,128], index: 1, kind: input, shape index: {}]
  %s2 = inlined_call_operand.hbm [shape: f32[16,128], index: 2, kind: output, shape index: {}]
  %s3 = sld [smem:[#allocation0]]
  $region26: #{tpu_custom_call.1} parent=0
    _
  %s5 = ssub.s32 1, %s3
  %s6 = scalar_select 0, %s5, %s3
  $region1: #{tpu_custom_call.1} parent=0
    #allocation2 [shape = 'u8[8192]{0}', space=vmem, size = 0x2000, scoped, tag = 'input window, operand 0, single buffered']
    #allocation3 [shape = 's32[1]{0}', space=sflag, size = 0x4, scoped, tag = 'scoped memory for tpu_custom_call.1']
    #allocation4 [shape = 's32[1]{0}', space=sflag, size = 0x4, scoped, tag = 'scoped memory for tpu_custom_call.1']
    #allocation5 [shape = 'u8[348160]{0}', space=vmem, size = 0x55000, scoped, tag = 'input window, operand 1, single buffered']
    #allocation6 [shape = 's32[1]{0}', space=sflag, size = 0x4, scoped, tag = 'scoped memory for tpu_custom_call.1']
    #allocation7 [shape = 'u8[8192]{0}', space=vmem, size = 0x2000, scoped, tag = 'output window, operand 0, single buffered']
    %7 = vsyncpa [#allocation3], 0
    %8 = vsyncpa [#allocation6], 0
    %9 = vsyncpa [#allocation4], 0
    // Predicated region
    $region2: #{tpu_custom_call.1} parent=1 // pred_check
      _
    $region3: #{tpu_custom_call.1} parent=1 // pred_check_branch
      %11 = sbr.rel (0) target = $region5
    $region4: #{tpu_custom_call.1} parent=1 // pred_region
      %s13 = ssub.s32 256, 256
      %14 = vsyncadd [#allocation3], %s13
      %s15 = sshll.u32 [#allocation2], 4
      %s16 = int_to_ptr.vmem [resolvable:$true] %s15
      %21 = dma.hbm_to_vmem [thread:$0]  %s0, 256, %s16, [#allocation3], 128, 128, 8
    $region5: #{tpu_custom_call.1} parent=1 // pred_fallthru
      _
    // Predicated region
    $region6: #{tpu_custom_call.1} parent=1 // pred_check
      _
    $region7: #{tpu_custom_call.1} parent=1 // pred_check_branch
      %23 = sbr.rel (0) target = $region9
    $region8: #{tpu_custom_call.1} parent=1 // pred_region
      %s25 = ssub.s32 10880, 10880
      %26 = vsyncadd [#allocation6], %s25
      %s27 = sshll.u32 [#allocation5], 4
      %s28 = int_to_ptr.vmem [resolvable:$true] %s27
      %33 = dma.hbm_to_vmem [thread:$0]  %s1, 10880, %s28, [#allocation6], 128, 128, 8
    $region9: #{tpu_custom_call.1} parent=1 // pred_fallthru
      _
    // Predicated region
    $region10: #{tpu_custom_call.1} parent=1 // pred_check
      _
    $region11: #{tpu_custom_call.1} parent=1 // pred_check_branch
      %35 = sbr.rel (0) target = $region13
    $region12: #{tpu_custom_call.1} parent=1 // pred_region
      %36 = dma.done [#allocation3], 256
    $region13: #{tpu_custom_call.1} parent=1 // pred_fallthru
      _
    // Predicated region
    $region14: #{tpu_custom_call.1} parent=1 // pred_check
      _
    $region15: #{tpu_custom_call.1} parent=1 // pred_check_branch
      %38 = sbr.rel (0) target = $region17
    $region16: #{tpu_custom_call.1} parent=1 // pred_region
      %39 = dma.done [#allocation6], 10880
    $region17: #{tpu_custom_call.1} parent=1 // pred_fallthru
      _
    %v40 = vld [vmem:[#allocation2] sm:$0xff]
    %v41 = vld [vmem:[#allocation2 + $0x8] sm:$0xff]
    %v42 = vld [vmem:[#allocation5] sm:$0xff]
    %v43 = vld [vmem:[#allocation5 + $0x8] sm:$0xff]
    %v44 = vld [vmem:[#allocation5 + $0x10] sm:$0xff]
    %v45 = vld [vmem:[#allocation5 + $0x18] sm:$0xff]
    %v46 = vld [vmem:[#allocation5 + $0x20] sm:$0xff]
    %v47 = vld [vmem:[#allocation5 + $0x28] sm:$0xff]
    %v48 = vld [vmem:[#allocation5 + $0x30] sm:$0xff]
    %v49 = vld [vmem:[#allocation5 + $0x38] sm:$0xff]
    %v50 = vld [vmem:[#allocation5 + $0x40] sm:$0xff]
    %v51 = vld [vmem:[#allocation5 + $0x48] sm:$0xff]
    %v52 = vld [vmem:[#allocation5 + $0x50] sm:$0xff]
    %v53 = vld [vmem:[#allocation5 + $0x58] sm:$0xff]
    %v54 = vld [vmem:[#allocation5 + $0x60] sm:$0xff]
    %v55 = vld [vmem:[#allocation5 + $0x68] sm:$0xff]
    %v56 = vld [vmem:[#allocation5 + $0x70] sm:$0xff]
    %v57 = vld [vmem:[#allocation5 + $0x78] sm:$0xff]
    %v58 = vld [vmem:[#allocation5 + $0x80] sm:$0xff]
    %v59 = vlaneseq
    %v60 = vshrl.u32 %v59, 7
    %v61 = vsub.s32 0, %v60
    %v62 = vrot.slane %v58, %v61
    %63 = vmatprep.subr.mxu0 0.0
    %64 = vmatpush1.msra.mxu0 %v57
    %65 = vmatprep.subr.mxu0 0.0
    %66 = vmatpush1.msra.mxu0 %v56
    %67 = vmatprep.subr.mxu0 0.0
    %68 = vmatpush1.msra.mxu0 %v55
    %69 = vmatprep.subr.mxu0 0.0
    %70 = vmatpush1.msra.mxu0 %v54
    %71 = vmatprep.subr.mxu0 0.0
    %72 = vmatpush1.msra.mxu0 %v53
    %73 = vmatprep.subr.mxu0 0.0
    %74 = vmatpush1.msra.mxu0 %v52
    %75 = vmatprep.subr.mxu0 0.0
    %76 = vmatpush1.msra.mxu0 %v51
    %77 = vmatprep.subr.mxu0 0.0
    %78 = vmatpush1.msra.mxu0 %v50
    %79 = vmatprep.subr.mxu0 0.0
    %80 = vmatpush1.msra.mxu0 %v49
    %81 = vmatprep.subr.mxu0 0.0
    %82 = vmatpush1.msra.mxu0 %v48
    %83 = vmatprep.subr.mxu0 0.0
    %84 = vmatpush1.msra.mxu0 %v47
    %85 = vmatprep.subr.mxu0 0.0
    %86 = vmatpush1.msra.mxu0 %v46
    %87 = vmatprep.subr.mxu0 0.0
    %88 = vmatpush1.msra.mxu0 %v45
    %89 = vmatprep.subr.mxu0 0.0
    %90 = vmatpush1.msra.mxu0 %v44
    %91 = vmatprep.subr.mxu0 0.0
    %92 = vmatpush1.msra.mxu0 %v43
    %93 = vmatprep.subr.mxu0 0.0
    %94 = vmatpush1.msra.mxu0 %v42
    %95 = vmatprep.subr.mxu0 0.0
    %96 = vmatpush2.msra.mxu0 0.0
    %97 = vmatprep.subr.mxu0 0.0
    %98 = vmatpush2.msra.mxu0 0.0
    %99 = vmatprep.subr.mxu0 0.0
    %100 = vmatpush2.msra.mxu0 0.0
    %101 = vmatprep.subr.mxu0 0.0
    %102 = vmatpush2.msra.mxu0 0.0
    %103 = vmatprep.subr.mxu0 0.0
    %104 = vmatpush2.msra.mxu0 0.0
    %105 = vmatprep.subr.mxu0 0.0
    %106 = vmatpush2.msra.mxu0 0.0
    %107 = vmatprep.subr.mxu0 0.0
    %108 = vmatpush2.msra.mxu0 0.0
    %109 = vmatprep.subr.mxu0 0.0
    %110 = vmatpush2.msra.mxu0 0.0
    %111 = vmatprep.subr.mxu0 0.0
    %112 = vmatpush2.msra.mxu0 0.0
    %113 = vmatprep.subr.mxu0 0.0
    %114 = vmatpush2.msra.mxu0 0.0
    %115 = vmatprep.subr.mxu0 0.0
    %116 = vmatpush2.msra.mxu0 0.0
    %117 = vmatprep.subr.mxu0 0.0
    %118 = vmatpush2.msra.mxu0 0.0
    %119 = vmatprep.subr.mxu0 0.0
    %120 = vmatpush2.msra.mxu0 0.0
    %121 = vmatprep.subr.mxu0 0.0
    %122 = vmatpush2.msra.mxu0 0.0
    %123 = vmatprep.subr.mxu0 0.0
    %124 = vmatpush2.msra.mxu0 0.0
    %125 = vmatprep.subr.mxu0 0.0
    %126 = vmatpush2.msra.mxu0 0.0
    %127 = vmatprep.mubr.f32.mxu0 0.0
    %128 = vmatmul.mubr.f32.gmra.mxu0 %v40
    %v129 = vpop.f32.mrf.mxu0
    %v130 = vadd.f32 %v62, %v129
    %v131 = vpop.f32.mrf.mxu0
    %132 = vmatprep.mubr.f32.mxu0 0.0
    %133 = vmatmul.mubr.f32.gmra.mxu0 %v41
    %v134 = vpop.f32.mrf.mxu0
    %v135 = vadd.f32 %v62, %v134
    %v136 = vpop.f32.mrf.mxu0
    %137 = vdwg.mxu0
    %v138 = vmax.f32 %v130, 0.0
    %v139 = vmax.f32 %v135, 0.0
    %s140 = scalar_lea.vmem [#allocation5], 136
    %v141 = vld [vmem:[%s140] sm:$0xff]
    %v142 = vld [vmem:[%s140 + $0x8] sm:$0xff]
    %v143 = vld [vmem:[%s140 + $0x10] sm:$0xff]
    %v144 = vld [vmem:[%s140 + $0x18] sm:$0xff]
    %v145 = vld [vmem:[%s140 + $0x20] sm:$0xff]
    %v146 = vld [vmem:[%s140 + $0x28] sm:$0xff]
    %v147 = vld [vmem:[%s140 + $0x30] sm:$0xff]
    %v148 = vld [vmem:[%s140 + $0x38] sm:$0xff]
    %v149 = vld [vmem:[%s140 + $0x40] sm:$0xff]
    %v150 = vld [vmem:[%s140 + $0x48] sm:$0xff]
    %v151 = vld [vmem:[%s140 + $0x50] sm:$0xff]
    %v152 = vld [vmem:[%s140 + $0x58] sm:$0xff]
    %v153 = vld [vmem:[%s140 + $0x60] sm:$0xff]
    %v154 = vld [vmem:[%s140 + $0x68] sm:$0xff]
    %v155 = vld [vmem:[%s140 + $0x70] sm:$0xff]
    %v156 = vld [vmem:[%s140 + $0x78] sm:$0xff]
    %v157 = vld [vmem:[%s140 + $0x80] sm:$0xff]
    %v158 = vlaneseq
    %v159 = vshrl.u32 %v158, 7
    %v160 = vsub.s32 0, %v159
    %v161 = vrot.slane %v157, %v160
    %162 = vmatprep.subr.mxu0 0.0
    %163 = vmatpush1.msra.mxu0 %v156
    %164 = vmatprep.subr.mxu0 0.0
    %165 = vmatpush1.msra.mxu0 %v155
    %166 = vmatprep.subr.mxu0 0.0
    %167 = vmatpush1.msra.mxu0 %v154
    %168 = vmatprep.subr.mxu0 0.0
    %169 = vmatpush1.msra.mxu0 %v153
    %170 = vmatprep.subr.mxu0 0.0
    %171 = vmatpush1.msra.mxu0 %v152
    %172 = vmatprep.subr.mxu0 0.0
    %173 = vmatpush1.msra.mxu0 %v151
    %174 = vmatprep.subr.mxu0 0.0
    %175 = vmatpush1.msra.mxu0 %v150
    %176 = vmatprep.subr.mxu0 0.0
    %177 = vmatpush1.msra.mxu0 %v149
    %178 = vmatprep.subr.mxu0 0.0
    %179 = vmatpush1.msra.mxu0 %v148
    %180 = vmatprep.subr.mxu0 0.0
    %181 = vmatpush1.msra.mxu0 %v147
    %182 = vmatprep.subr.mxu0 0.0
    %183 = vmatpush1.msra.mxu0 %v146
    %184 = vmatprep.subr.mxu0 0.0
    %185 = vmatpush1.msra.mxu0 %v145
    %186 = vmatprep.subr.mxu0 0.0
    %187 = vmatpush1.msra.mxu0 %v144
    %188 = vmatprep.subr.mxu0 0.0
    %189 = vmatpush1.msra.mxu0 %v143
    %190 = vmatprep.subr.mxu0 0.0
    %191 = vmatpush1.msra.mxu0 %v142
    %192 = vmatprep.subr.mxu0 0.0
    %193 = vmatpush1.msra.mxu0 %v141
    %194 = vmatprep.subr.mxu0 0.0
    %195 = vmatpush2.msra.mxu0 0.0
    %196 = vmatprep.subr.mxu0 0.0
    %197 = vmatpush2.msra.mxu0 0.0
    %198 = vmatprep.subr.mxu0 0.0
    %199 = vmatpush2.msra.mxu0 0.0
    %200 = vmatprep.subr.mxu0 0.0
    %201 = vmatpush2.msra.mxu0 0.0
    %202 = vmatprep.subr.mxu0 0.0
    %203 = vmatpush2.msra.mxu0 0.0
    %204 = vmatprep.subr.mxu0 0.0
    %205 = vmatpush2.msra.mxu0 0.0
    %206 = vmatprep.subr.mxu0 0.0
    %207 = vmatpush2.msra.mxu0 0.0
    %208 = vmatprep.subr.mxu0 0.0
    %209 = vmatpush2.msra.mxu0 0.0
    %210 = vmatprep.subr.mxu0 0.0
    %211 = vmatpush2.msra.mxu0 0.0
    %212 = vmatprep.subr.mxu0 0.0
    %213 = vmatpush2.msra.mxu0 0.0
    %214 = vmatprep.subr.mxu0 0.0
    %215 = vmatpush2.msra.mxu0 0.0
    %216 = vmatprep.subr.mxu0 0.0
    %217 = vmatpush2.msra.mxu0 0.0
    %218 = vmatprep.subr.mxu0 0.0
    %219 = vmatpush2.msra.mxu0 0.0
    %220 = vmatprep.subr.mxu0 0.0
    %221 = vmatpush2.msra.mxu0 0.0
    %222 = vmatprep.subr.mxu0 0.0
    %223 = vmatpush2.msra.mxu0 0.0
    %224 = vmatprep.subr.mxu0 0.0
    %225 = vmatpush2.msra.mxu0 0.0
    %226 = vmatprep.mubr.f32.mxu0 0.0
    %227 = vmatmul.mubr.f32.gmra.mxu0 %v138
    %v228 = vpop.f32.mrf.mxu0
    %v229 = vadd.f32 %v161, %v228
    %v230 = vpop.f32.mrf.mxu0
    %231 = vmatprep.mubr.f32.mxu0 0.0
    %232 = vmatmul.mubr.f32.gmra.mxu0 %v139
    %v233 = vpop.f32.mrf.mxu0
    %v234 = vadd.f32 %v161, %v233
    %v235 = vpop.f32.mrf.mxu0
    %236 = vdwg.mxu0
    %v237 = vmax.f32 %v229, 0.0
    %v238 = vmax.f32 %v234, 0.0
    %s239 = scalar_lea.vmem [#allocation5], 272
    %v240 = vld [vmem:[%s239] sm:$0xff]
    %v241 = vld [vmem:[%s239 + $0x8] sm:$0xff]
    %v242 = vld [vmem:[%s239 + $0x10] sm:$0xff]
    %v243 = vld [vmem:[%s239 + $0x18] sm:$0xff]
    %v244 = vld [vmem:[%s239 + $0x20] sm:$0xff]
    %v245 = vld [vmem:[%s239 + $0x28] sm:$0xff]
    %v246 = vld [vmem:[%s239 + $0x30] sm:$0xff]
    %v247 = vld [vmem:[%s239 + $0x38] sm:$0xff]
    %v248 = vld [vmem:[%s239 + $0x40] sm:$0xff]
    %v249 = vld [vmem:[%s239 + $0x48] sm:$0xff]
    %v250 = vld [vmem:[%s239 + $0x50] sm:$0xff]
    %v251 = vld [vmem:[%s239 + $0x58] sm:$0xff]
    %v252 = vld [vmem:[%s239 + $0x60] sm:$0xff]
    %v253 = vld [vmem:[%s239 + $0x68] sm:$0xff]
    %v254 = vld [vmem:[%s239 + $0x70] sm:$0xff]
    %v255 = vld [vmem:[%s239 + $0x78] sm:$0xff]
    %v256 = vld [vmem:[%s239 + $0x80] sm:$0xff]
    %v257 = vlaneseq
    %v258 = vshrl.u32 %v257, 7
    %v259 = vsub.s32 0, %v258
    %v260 = vrot.slane %v256, %v259
    %261 = vmatprep.subr.mxu0 0.0
    %262 = vmatpush1.msra.mxu0 %v255
    %263 = vmatprep.subr.mxu0 0.0
    %264 = vmatpush1.msra.mxu0 %v254
    %265 = vmatprep.subr.mxu0 0.0
    %266 = vmatpush1.msra.mxu0 %v253
    %267 = vmatprep.subr.mxu0 0.0
    %268 = vmatpush1.msra.mxu0 %v252
    %269 = vmatprep.subr.mxu0 0.0
    %270 = vmatpush1.msra.mxu0 %v251
    %271 = vmatprep.subr.mxu0 0.0
    %272 = vmatpush1.msra.mxu0 %v250
    %273 = vmatprep.subr.mxu0 0.0
    %274 = vmatpush1.msra.mxu0 %v249
    %275 = vmatprep.subr.mxu0 0.0
    %276 = vmatpush1.msra.mxu0 %v248
    %277 = vmatprep.subr.mxu0 0.0
    %278 = vmatpush1.msra.mxu0 %v247
    %279 = vmatprep.subr.mxu0 0.0
    %280 = vmatpush1.msra.mxu0 %v246
    %281 = vmatprep.subr.mxu0 0.0
    %282 = vmatpush1.msra.mxu0 %v245
    %283 = vmatprep.subr.mxu0 0.0
    %284 = vmatpush1.msra.mxu0 %v244
    %285 = vmatprep.subr.mxu0 0.0
    %286 = vmatpush1.msra.mxu0 %v243
    %287 = vmatprep.subr.mxu0 0.0
    %288 = vmatpush1.msra.mxu0 %v242
    %289 = vmatprep.subr.mxu0 0.0
    %290 = vmatpush1.msra.mxu0 %v241
    %291 = vmatprep.subr.mxu0 0.0
    %292 = vmatpush1.msra.mxu0 %v240
    %293 = vmatprep.subr.mxu0 0.0
    %294 = vmatpush2.msra.mxu0 0.0
    %295 = vmatprep.subr.mxu0 0.0
    %296 = vmatpush2.msra.mxu0 0.0
    %297 = vmatprep.subr.mxu0 0.0
    %298 = vmatpush2.msra.mxu0 0.0
    %299 = vmatprep.subr.mxu0 0.0
    %300 = vmatpush2.msra.mxu0 0.0
    %301 = vmatprep.subr.mxu0 0.0
    %302 = vmatpush2.msra.mxu0 0.0
    %303 = vmatprep.subr.mxu0 0.0
    %304 = vmatpush2.msra.mxu0 0.0
    %305 = vmatprep.subr.mxu0 0.0
    %306 = vmatpush2.msra.mxu0 0.0
    %307 = vmatprep.subr.mxu0 0.0
    %308 = vmatpush2.msra.mxu0 0.0
    %309 = vmatprep.subr.mxu0 0.0
    %310 = vmatpush2.msra.mxu0 0.0
    %311 = vmatprep.subr.mxu0 0.0
    %312 = vmatpush2.msra.mxu0 0.0
    %313 = vmatprep.subr.mxu0 0.0
    %314 = vmatpush2.msra.mxu0 0.0
    %315 = vmatprep.subr.mxu0 0.0
    %316 = vmatpush2.msra.mxu0 0.0
    %317 = vmatprep.subr.mxu0 0.0
    %318 = vmatpush2.msra.mxu0 0.0
    %319 = vmatprep.subr.mxu0 0.0
    %320 = vmatpush2.msra.mxu0 0.0
    %321 = vmatprep.subr.mxu0 0.0
    %322 = vmatpush2.msra.mxu0 0.0
    %323 = vmatprep.subr.mxu0 0.0
    %324 = vmatpush2.msra.mxu0 0.0
    %325 = vmatprep.mubr.f32.mxu0 0.0
    %326 = vmatmul.mubr.f32.gmra.mxu0 %v237
    %v327 = vpop.f32.mrf.mxu0
    %v328 = vadd.f32 %v260, %v327
    %v329 = vpop.f32.mrf.mxu0
    %330 = vmatprep.mubr.f32.mxu0 0.0
    %331 = vmatmul.mubr.f32.gmra.mxu0 %v238
    %v332 = vpop.f32.mrf.mxu0
    %v333 = vadd.f32 %v260, %v332
    %v334 = vpop.f32.mrf.mxu0
    %335 = vdwg.mxu0
    %v336 = vmax.f32 %v328, 0.0
    %v337 = vmax.f32 %v333, 0.0
    %s338 = scalar_lea.vmem [#allocation5], 408
    %v339 = vld [vmem:[%s338] sm:$0xff]
    %v340 = vld [vmem:[%s338 + $0x8] sm:$0xff]
    %v341 = vld [vmem:[%s338 + $0x10] sm:$0xff]
    %v342 = vld [vmem:[%s338 + $0x18] sm:$0xff]
    %v343 = vld [vmem:[%s338 + $0x20] sm:$0xff]
    %v344 = vld [vmem:[%s338 + $0x28] sm:$0xff]
    %v345 = vld [vmem:[%s338 + $0x30] sm:$0xff]
    %v346 = vld [vmem:[%s338 + $0x38] sm:$0xff]
    %v347 = vld [vmem:[%s338 + $0x40] sm:$0xff]
    %v348 = vld [vmem:[%s338 + $0x48] sm:$0xff]
    %v349 = vld [vmem:[%s338 + $0x50] sm:$0xff]
    %v350 = vld [vmem:[%s338 + $0x58] sm:$0xff]
    %v351 = vld [vmem:[%s338 + $0x60] sm:$0xff]
    %v352 = vld [vmem:[%s338 + $0x68] sm:$0xff]
    %v353 = vld [vmem:[%s338 + $0x70] sm:$0xff]
    %v354 = vld [vmem:[%s338 + $0x78] sm:$0xff]
    %v355 = vld [vmem:[%s338 + $0x80] sm:$0xff]
    %v356 = vlaneseq
    %v357 = vshrl.u32 %v356, 7
    %v358 = vsub.s32 0, %v357
    %v359 = vrot.slane %v355, %v358
    %360 = vmatprep.subr.mxu0 0.0
    %361 = vmatpush1.msra.mxu0 %v354
    %362 = vmatprep.subr.mxu0 0.0
    %363 = vmatpush1.msra.mxu0 %v353
    %364 = vmatprep.subr.mxu0 0.0
    %365 = vmatpush1.msra.mxu0 %v352
    %366 = vmatprep.subr.mxu0 0.0
    %367 = vmatpush1.msra.mxu0 %v351
    %368 = vmatprep.subr.mxu0 0.0
    %369 = vmatpush1.msra.mxu0 %v350
    %370 = vmatprep.subr.mxu0 0.0
    %371 = vmatpush1.msra.mxu0 %v349
    %372 = vmatprep.subr.mxu0 0.0
    %373 = vmatpush1.msra.mxu0 %v348
    %374 = vmatprep.subr.mxu0 0.0
    %375 = vmatpush1.msra.mxu0 %v347
    %376 = vmatprep.subr.mxu0 0.0
    %377 = vmatpush1.msra.mxu0 %v346
    %378 = vmatprep.subr.mxu0 0.0
    %379 = vmatpush1.msra.mxu0 %v345
    %380 = vmatprep.subr.mxu0 0.0
    %381 = vmatpush1.msra.mxu0 %v344
    %382 = vmatprep.subr.mxu0 0.0
    %383 = vmatpush1.msra.mxu0 %v343
    %384 = vmatprep.subr.mxu0 0.0
    %385 = vmatpush1.msra.mxu0 %v342
    %386 = vmatprep.subr.mxu0 0.0
    %387 = vmatpush1.msra.mxu0 %v341
    %388 = vmatprep.subr.mxu0 0.0
    %389 = vmatpush1.msra.mxu0 %v340
    %390 = vmatprep.subr.mxu0 0.0
    %391 = vmatpush1.msra.mxu0 %v339
    %392 = vmatprep.subr.mxu0 0.0
    %393 = vmatpush2.msra.mxu0 0.0
    %394 = vmatprep.subr.mxu0 0.0
    %395 = vmatpush2.msra.mxu0 0.0
    %396 = vmatprep.subr.mxu0 0.0
    %397 = vmatpush2.msra.mxu0 0.0
    %398 = vmatprep.subr.mxu0 0.0
    %399 = vmatpush2.msra.mxu0 0.0
    %400 = vmatprep.subr.mxu0 0.0
    %401 = vmatpush2.msra.mxu0 0.0
    %402 = vmatprep.subr.mxu0 0.0
    %403 = vmatpush2.msra.mxu0 0.0
    %404 = vmatprep.subr.mxu0 0.0
    %405 = vmatpush2.msra.mxu0 0.0
    %406 = vmatprep.subr.mxu0 0.0
    %407 = vmatpush2.msra.mxu0 0.0
    %408 = vmatprep.subr.mxu0 0.0
    %409 = vmatpush2.msra.mxu0 0.0
    %410 = vmatprep.subr.mxu0 0.0
    %411 = vmatpush2.msra.mxu0 0.0
    %412 = vmatprep.subr.mxu0 0.0
    %413 = vmatpush2.msra.mxu0 0.0
    %414 = vmatprep.subr.mxu0 0.0
    %415 = vmatpush2.msra.mxu0 0.0
    %416 = vmatprep.subr.mxu0 0.0
    %417 = vmatpush2.msra.mxu0 0.0
    %418 = vmatprep.subr.mxu0 0.0
    %419 = vmatpush2.msra.mxu0 0.0
    %420 = vmatprep.subr.mxu0 0.0
    %421 = vmatpush2.msra.mxu0 0.0
    %422 = vmatprep.subr.mxu0 0.0
    %423 = vmatpush2.msra.mxu0 0.0
    %424 = vmatprep.mubr.f32.mxu0 0.0
    %425 = vmatmul.mubr.f32.gmra.mxu0 %v336
    %v426 = vpop.f32.mrf.mxu0
    %v427 = vadd.f32 %v359, %v426
    %v428 = vpop.f32.mrf.mxu0
    %429 = vmatprep.mubr.f32.mxu0 0.0
    %430 = vmatmul.mubr.f32.gmra.mxu0 %v337
    %v431 = vpop.f32.mrf.mxu0
    %v432 = vadd.f32 %v359, %v431
    %v433 = vpop.f32.mrf.mxu0
    %434 = vdwg.mxu0
    %v435 = vmax.f32 %v427, 0.0
    %v436 = vmax.f32 %v432, 0.0
    %s437 = scalar_lea.vmem [#allocation5], 544
    %v438 = vld [vmem:[%s437] sm:$0xff]
    %v439 = vld [vmem:[%s437 + $0x8] sm:$0xff]
    %v440 = vld [vmem:[%s437 + $0x10] sm:$0xff]
    %v441 = vld [vmem:[%s437 + $0x18] sm:$0xff]
    %v442 = vld [vmem:[%s437 + $0x20] sm:$0xff]
    %v443 = vld [vmem:[%s437 + $0x28] sm:$0xff]
    %v444 = vld [vmem:[%s437 + $0x30] sm:$0xff]
    %v445 = vld [vmem:[%s437 + $0x38] sm:$0xff]
    %v446 = vld [vmem:[%s437 + $0x40] sm:$0xff]
    %v447 = vld [vmem:[%s437 + $0x48] sm:$0xff]
    %v448 = vld [vmem:[%s437 + $0x50] sm:$0xff]
    %v449 = vld [vmem:[%s437 + $0x58] sm:$0xff]
    %v450 = vld [vmem:[%s437 + $0x60] sm:$0xff]
    %v451 = vld [vmem:[%s437 + $0x68] sm:$0xff]
    %v452 = vld [vmem:[%s437 + $0x70] sm:$0xff]
    %v453 = vld [vmem:[%s437 + $0x78] sm:$0xff]
    %v454 = vld [vmem:[%s437 + $0x80] sm:$0xff]
    %v455 = vlaneseq
    %v456 = vshrl.u32 %v455, 7
    %v457 = vsub.s32 0, %v456
    %v458 = vrot.slane %v454, %v457
    %459 = vmatprep.subr.mxu0 0.0
    %460 = vmatpush1.msra.mxu0 %v453
    %461 = vmatprep.subr.mxu0 0.0
    %462 = vmatpush1.msra.mxu0 %v452
    %463 = vmatprep.subr.mxu0 0.0
    %464 = vmatpush1.msra.mxu0 %v451
    %465 = vmatprep.subr.mxu0 0.0
    %466 = vmatpush1.msra.mxu0 %v450
    %467 = vmatprep.subr.mxu0 0.0
    %468 = vmatpush1.msra.mxu0 %v449
    %469 = vmatprep.subr.mxu0 0.0
    %470 = vmatpush1.msra.mxu0 %v448
    %471 = vmatprep.subr.mxu0 0.0
    %472 = vmatpush1.msra.mxu0 %v447
    %473 = vmatprep.subr.mxu0 0.0
    %474 = vmatpush1.msra.mxu0 %v446
    %475 = vmatprep.subr.mxu0 0.0
    %476 = vmatpush1.msra.mxu0 %v445
    %477 = vmatprep.subr.mxu0 0.0
    %478 = vmatpush1.msra.mxu0 %v444
    %479 = vmatprep.subr.mxu0 0.0
    %480 = vmatpush1.msra.mxu0 %v443
    %481 = vmatprep.subr.mxu0 0.0
    %482 = vmatpush1.msra.mxu0 %v442
    %483 = vmatprep.subr.mxu0 0.0
    %484 = vmatpush1.msra.mxu0 %v441
    %485 = vmatprep.subr.mxu0 0.0
    %486 = vmatpush1.msra.mxu0 %v440
    %487 = vmatprep.subr.mxu0 0.0
    %488 = vmatpush1.msra.mxu0 %v439
    %489 = vmatprep.subr.mxu0 0.0
    %490 = vmatpush1.msra.mxu0 %v438
    %491 = vmatprep.subr.mxu0 0.0
    %492 = vmatpush2.msra.mxu0 0.0
    %493 = vmatprep.subr.mxu0 0.0
    %494 = vmatpush2.msra.mxu0 0.0
    %495 = vmatprep.subr.mxu0 0.0
    %496 = vmatpush2.msra.mxu0 0.0
    %497 = vmatprep.subr.mxu0 0.0
    %498 = vmatpush2.msra.mxu0 0.0
    %499 = vmatprep.subr.mxu0 0.0
    %500 = vmatpush2.msra.mxu0 0.0
    %501 = vmatprep.subr.mxu0 0.0
    %502 = vmatpush2.msra.mxu0 0.0
    %503 = vmatprep.subr.mxu0 0.0
    %504 = vmatpush2.msra.mxu0 0.0
    %505 = vmatprep.subr.mxu0 0.0
    %506 = vmatpush2.msra.mxu0 0.0
    %507 = vmatprep.subr.mxu0 0.0
    %508 = vmatpush2.msra.mxu0 0.0
    %509 = vmatprep.subr.mxu0 0.0
    %510 = vmatpush2.msra.mxu0 0.0
    %511 = vmatprep.subr.mxu0 0.0
    %512 = vmatpush2.msra.mxu0 0.0
    %513 = vmatprep.subr.mxu0 0.0
    %514 = vmatpush2.msra.mxu0 0.0
    %515 = vmatprep.subr.mxu0 0.0
    %516 = vmatpush2.msra.mxu0 0.0
    %517 = vmatprep.subr.mxu0 0.0
    %518 = vmatpush2.msra.mxu0 0.0
    %519 = vmatprep.subr.mxu0 0.0
    %520 = vmatpush2.msra.mxu0 0.0
    %521 = vmatprep.subr.mxu0 0.0
    %522 = vmatpush2.msra.mxu0 0.0
    %523 = vmatprep.mubr.f32.mxu0 0.0
    %524 = vmatmul.mubr.f32.gmra.mxu0 %v435
    %v525 = vpop.f32.mrf.mxu0
    %v526 = vadd.f32 %v458, %v525
    %v527 = vpop.f32.mrf.mxu0
    %528 = vmatprep.mubr.f32.mxu0 0.0
    %529 = vmatmul.mubr.f32.gmra.mxu0 %v436
    %v530 = vpop.f32.mrf.mxu0
    %v531 = vadd.f32 %v458, %v530
    %v532 = vpop.f32.mrf.mxu0
    %533 = vdwg.mxu0
    %v534 = vxor.u32 %v526, 2147483648
    %v535 = vxor.u32 %v531, 2147483648
    %v536 = vmul.f32 %v534, 1.442695
    %v537 = vpow.pop %v536
    %v538 = vmul.f32 %v535, 1.442695
    %v539 = vpow.pop %v538
    %v540 = vadd.f32 %v537, 1.0
    %v541 = vadd.f32 %v539, 1.0
    %v542 = vrcp.pop %v540
    %v543 = vmul.f32 1.0, %v542
    %v544 = vrcp.pop %v541
    %v545 = vmul.f32 1.0, %v544
    %546 = vst [vmem:[#allocation7] sm:$0xff] %v543
    %547 = vst [vmem:[#allocation7 + $0x8] sm:$0xff] %v545
    // Predicated region
    $region18: #{tpu_custom_call.1} parent=1 // pred_check
      _
    $region19: #{tpu_custom_call.1} parent=1 // pred_check_branch
      %549 = sbr.rel (0) target = $region21
    $region20: #{tpu_custom_call.1} parent=1 // pred_region
      %s551 = ssub.s32 256, 256
      %552 = vsyncadd [#allocation4], %s551
      %s553 = sshll.u32 [#allocation7], 4
      %s554 = int_to_ptr.vmem [resolvable:$true] %s553
      %559 = dma.vmem_to_hbm [thread:$0]  %s554, 256, %s2, [#allocation4], 128, 128, 8
    $region21: #{tpu_custom_call.1} parent=1 // pred_fallthru
      _
    // Predicated region
    $region22: #{tpu_custom_call.1} parent=1 // pred_check
      _
    $region23: #{tpu_custom_call.1} parent=1 // pred_check_branch
      %561 = sbr.rel (0) target = $region25
    $region24: #{tpu_custom_call.1} parent=1 // pred_region
      %562 = dma.done [#allocation4], 256
    $region25: #{tpu_custom_call.1} parent=1 // pred_fallthru
      _
    %563 = vsyncpa [#allocation3], 1
    %564 = vsyncpa [#allocation6], 1
    %565 = vsyncpa [#allocation4], 1

</llo_original>
